<compile_context>
chip_gen: v5e
topology: v5e:2x2
jax: 0.10.0
libtpu: 0.0.40
codegen_flags: <defaults>
</compile_context>

<pallas_src>
import jax
import jax.numpy as jnp
from jax.experimental import pallas as pl
from jax.experimental.pallas import tpu as pltpu


def _round_up(n, m):
    return ((n + m - 1) // m) * m


def _soi_kernel(x_ref, v_ref, s_ref, o_ref):
    x = x_ref[...].astype(jnp.float32)          # (TB, F)
    v = v_ref[...].astype(jnp.float32)          # (F, K)   resident
    s = s_ref[...]                              # (F, 1)   resident, f32

    xv = jnp.dot(x, v,
                 preferred_element_type=jnp.float32,
                 precision=jax.lax.Precision.HIGHEST)          # (TB, K)
    x2s = jnp.dot(x * x, s,
                  preferred_element_type=jnp.float32,
                  precision=jax.lax.Precision.HIGHEST)         # (TB, 1)

    res = 0.5 * (jnp.sum(xv * xv, axis=-1, keepdims=True) - x2s)   # (TB, 1)
    o_ref[...] = res.astype(o_ref.dtype)


def _choose_tb(b, f, target_bytes=4 << 20):
    """Batch tile: ~target_bytes of streamed x per grid step, lane/sublane legal,
    and at least 2 grid steps when the batch allows (v7x megacore)."""
    if b <= 128:
        return b                                  # full-dim block (always legal)
    if b <= 256:
        return _round_up(pl.cdiv(b, 2), 8)        # 2 steps, sublane-aligned
    rows = (target_bytes // (4 * f)) // 128 * 128
    tb = max(128, min(2048, rows))
    tb = min(tb, _round_up(pl.cdiv(b, 2), 128))   # keep >= 2 grid steps
    return max(128, tb)


def second_order_interaction(x, v, *, tb=None):
    """x: (B, F), v: (F, K) -> (B, 1)"""
    b, f = x.shape
    k = v.shape[1]

    if tb is None:
        tb = _choose_tb(b, f)
    grid = (pl.cdiv(b, tb),)

    # Precompute per-feature ||v_i||^2 once in the wrapper (O(F*K), negligible).
    s = jnp.sum(v.astype(jnp.float32) * v.astype(jnp.float32),
                axis=1, keepdims=True)            # (F, 1)

    flops = 2 * b * f * k + 2 * b * f + 4 * b * k
    bytes_accessed = 4 * (b * f + f * k + f + b)

    # Double-buffered x tiles + resident v/s + output, with slack; cap for v7x.
    vmem_needed = 4 * (2 * tb * f + 2 * f * k + 2 * f + 2 * tb) + (1 << 20)
    vmem_limit = int(min(max(vmem_needed, 16 << 20), 48 << 20))

    out = pl.pallas_call(
        _soi_kernel,
        out_shape=jax.ShapeDtypeStruct((b, 1), x.dtype),
        grid_spec=pltpu.PrefetchScalarGridSpec(
            num_scalar_prefetch=0,
            grid=grid,
            in_specs=[
                pl.BlockSpec((tb, f), lambda i: (i, 0)),   # streamed batch tiles
                pl.BlockSpec((f, k), lambda i: (0, 0)),    # v resident
                pl.BlockSpec((f, 1), lambda i: (0, 0)),    # s resident
            ],
            out_specs=pl.BlockSpec((tb, 1), lambda i: (i, 0)),
        ),
        compiler_params=pltpu.CompilerParams(
            dimension_semantics=("parallel",),
            vmem_limit_bytes=vmem_limit,
        ),
        cost_estimate=pl.CostEstimate(
            flops=flops, transcendentals=0, bytes_accessed=bytes_accessed
        ),
    )(x, v, s)

    return out


def _reference(x, v):
    a = v @ v.T
    f = a.shape[0]
    mask = jnp.triu(jnp.ones((f, f), dtype=bool), k=1)
    a = jnp.where(mask, a, 0.0)
    # sum_{i<j} A[i,j] x_i x_j = sum_j (x @ A)[.,j] * x[.,j]
    return jnp.sum((x @ a) * x, axis=-1, keepdims=True)


if __name__ == "__main__":
    key = jax.random.PRNGKey(0)
    kx, kv = jax.random.split(key)

    batch, n_feats, n_factors = 2, 16, 8

    x = jax.random.normal(kx, (batch, n_feats), dtype=jnp.float32)
    # matches nn.Parameter(torch.Tensor(n_feats, n_factors)).uniform_(-0.01, 0.01)
    v = jax.random.uniform(kv, (n_feats, n_factors), dtype=jnp.float32,
                           minval=-0.01, maxval=0.01)

    out = second_order_interaction(x, v)
    jax.block_until_ready(out)

    ref = _reference(x, v)
    assert out.shape == (batch, 1)
    assert jnp.allclose(out, ref, atol=1e-5, rtol=1e-5), (out, ref)

    print("KERNEL_OK")
</pallas_src>

<mosaic_0001>
module attributes {stable_mosaic.version = 11 : i64} {
  func.func @_soi_kernel(%arg0: i32, %arg1: memref<2x16xf32, #tpu.memory_space<vmem>>, %arg2: memref<16x8xf32, #tpu.memory_space<vmem>>, %arg3: memref<16x1xf32, #tpu.memory_space<vmem>>, %arg4: memref<2x1xf32, #tpu.memory_space<vmem>>) attributes {dimension_semantics = [#tpu.dimension_semantics<parallel>], iteration_bounds = array<i64: 1>, scalar_prefetch = 0 : i64, scratch_operands = 0 : i64, tpu.core_type = #tpu.core_type<tc>, window_params = [{transform_indices = @transform_0, window_bounds = array<i64: 2, 16>}, {pipeline_mode = #tpu.pipeline_mode<synchronous>, transform_indices = @transform_1, window_bounds = array<i64: 16, 8>}, {pipeline_mode = #tpu.pipeline_mode<synchronous>, transform_indices = @transform_2, window_bounds = array<i64: 16, 1>}, {transform_indices = @transform_3, window_bounds = array<i64: 2, 1>}]} {
    %c0 = arith.constant 0 : index
    %c0_0 = arith.constant 0 : index
    %0 = vector.load %arg1[%c0, %c0_0] : memref<2x16xf32, #tpu.memory_space<vmem>>, vector<2x16xf32>
    %c0_1 = arith.constant 0 : index
    %c0_2 = arith.constant 0 : index
    %1 = vector.load %arg2[%c0_1, %c0_2] : memref<16x8xf32, #tpu.memory_space<vmem>>, vector<16x8xf32>
    %c0_3 = arith.constant 0 : index
    %c0_4 = arith.constant 0 : index
    %2 = vector.load %arg3[%c0_3, %c0_4] : memref<16x1xf32, #tpu.memory_space<vmem>>, vector<16x1xf32>
    %cst = arith.constant dense<0.000000e+00> : vector<2x8xf32>
    %3 = tpu.matmul %0, %1, %cst {dimension_numbers = #tpu.dot_dimension_numbers<[1], [0], [0], [1], [0, 0, 1, 1], [], []>, precision = #tpu.contract_precision<fp32>} : vector<2x16xf32>, vector<16x8xf32>, vector<2x8xf32> -> vector<2x8xf32>
    %4 = arith.mulf %0, %0 : vector<2x16xf32>
    %cst_5 = arith.constant dense<0.000000e+00> : vector<2x1xf32>
    %5 = tpu.matmul %4, %2, %cst_5 {dimension_numbers = #tpu.dot_dimension_numbers<[1], [0], [0], [1], [0, 0, 1, 1], [], []>, precision = #tpu.contract_precision<fp32>} : vector<2x16xf32>, vector<16x1xf32>, vector<2x1xf32> -> vector<2x1xf32>
    %6 = arith.mulf %3, %3 : vector<2x8xf32>
    %cst_6 = arith.constant dense<0.000000e+00> : vector<2xf32>
    %7 = vector.multi_reduction <add>, %6, %cst_6 [1] : vector<2x8xf32> to vector<2xf32>
    %8 = vector.shape_cast %7 : vector<2xf32> to vector<2x1xf32>
    %9 = arith.subf %8, %5 : vector<2x1xf32>
    %cst_7 = arith.constant 5.000000e-01 : f32
    %10 = vector.broadcast %cst_7 : f32 to vector<2x1xf32>
    %11 = arith.mulf %10, %9 : vector<2x1xf32>
    %c0_8 = arith.constant 0 : index
    %c0_9 = arith.constant 0 : index
    %12 = vector.load %arg4[%c0_8, %c0_9] : memref<2x1xf32, #tpu.memory_space<vmem>>, vector<2x1xf32>
    tpu.vector_store %arg4[%c0_8, %c0_9], %11 {strides = array<i32>} : memref<2x1xf32, #tpu.memory_space<vmem>>, vector<2x1xf32>,
    return
  }
  func.func @transform_0(%arg0: i32) -> (i32, i32) {
    %c0_i32 = arith.constant 0 : i32
    %c0_i32_0 = arith.constant 0 : i32
    return %arg0, %c0_i32 : i32, i32
  }
  func.func @transform_1(%arg0: i32) -> (i32, i32) {
    %c0_i32 = arith.constant 0 : i32
    %c0_i32_0 = arith.constant 0 : i32
    %c0_i32_1 = arith.constant 0 : i32
    return %c0_i32, %c0_i32_0 : i32, i32
  }
  func.func @transform_2(%arg0: i32) -> (i32, i32) {
    %c0_i32 = arith.constant 0 : i32
    %c0_i32_0 = arith.constant 0 : i32
    %c0_i32_1 = arith.constant 0 : i32
    return %c0_i32, %c0_i32_0 : i32, i32
  }
  func.func @transform_3(%arg0: i32) -> (i32, i32) {
    %c0_i32 = arith.constant 0 : i32
    %c0_i32_0 = arith.constant 0 : i32
    return %arg0, %c0_i32 : i32, i32
  }
}

</mosaic_0001>

<llo_original>
// kernel: tpu_custom_call.1
$region0: #{tpu_custom_call.1}
  #allocation0 [shape = 'u32[]', space=smem, size = 0x4, offset = 0x4, fixed_abs, tag = 'smem constant byte address 0x4 - core index']
  #allocation1 [shape = 'u32[72,128]{1,0:T(1,128)}', space=vmem, size = 0x9000, scoped, tag = 'internal scratch']
  %s0 = inlined_call_operand.vmem [shape: f32[2,16], index: 0, kind: input, shape index: {}]
  %s1 = inlined_call_operand.vmem [shape: f32[16,8], index: 1, kind: input, shape index: {}]
  %s2 = inlined_call_operand.vmem [shape: f32[16,1], index: 2, kind: input, shape index: {}]
  %s3 = inlined_call_operand.vmem [shape: f32[2,1], index: 3, kind: output, shape index: {}]
  %s4 = sld [smem:[#allocation0]]
  $region22: #{tpu_custom_call.1} parent=0
    _
  %s6 = ssub.s32 1, %s4
  %s7 = scalar_select 0, %s6, %s4
  // Predicated region
  $region2: #{tpu_custom_call.1} parent=0 // pred_check
    _
  $region3: #{tpu_custom_call.1} parent=0 // pred_check_branch
    %9 = sbr.rel (0) target = $region5
  $region4: #{tpu_custom_call.1} parent=0 // pred_region
    _
  $region5: #{tpu_custom_call.1} parent=0 // pred_fallthru
    _
  // Predicated region
  $region6: #{tpu_custom_call.1} parent=0 // pred_check
    _
  $region7: #{tpu_custom_call.1} parent=0 // pred_check_branch
    %11 = sbr.rel (0) target = $region9
  $region8: #{tpu_custom_call.1} parent=0 // pred_region
    _
  $region9: #{tpu_custom_call.1} parent=0 // pred_fallthru
    _
  // Predicated region
  $region10: #{tpu_custom_call.1} parent=0 // pred_check
    _
  $region11: #{tpu_custom_call.1} parent=0 // pred_check_branch
    %13 = sbr.rel (0) target = $region13
  $region12: #{tpu_custom_call.1} parent=0 // pred_region
    _
  $region13: #{tpu_custom_call.1} parent=0 // pred_fallthru
    _
  %v14 = vld [vmem:[%s0] sm:$0x3]
  %v15 = vld [vmem:[%s1] sm:$0xff]
  %v16 = vld [vmem:[%s1 + $0x8] sm:$0xff]
  %v17 = vld [vmem:[%s2] sm:$0xff]
  %v18 = vld [vmem:[%s2 + $0x8] sm:$0xff]
  %vm19 = vcmask 130048
  %v21 = vsel %vm19, %v14, 0
  %23 = vmatpush.msra.mxu0 0.0
  %24 = vmatpush.msra.mxu0 0.0
  %25 = vmatpush.msra.mxu0 0.0
  %26 = vmatpush.msra.mxu0 0.0
  %27 = vmatpush.msra.mxu0 0.0
  %28 = vmatpush.msra.mxu0 0.0
  %29 = vmatpush.msra.mxu0 0.0
  %30 = vmatpush.msra.mxu0 0.0
  %31 = vmatpush.msra.mxu0 0.0
  %32 = vmatpush.msra.mxu0 0.0
  %33 = vmatpush.msra.mxu0 0.0
  %34 = vmatpush.msra.mxu0 0.0
  %35 = vmatpush.msra.mxu0 0.0
  %36 = vmatpush.msra.mxu0 0.0
  %v37 = vand.u32 %v16, 4294901760
  %38 = vmatpush.msra.mxu0 %v37
  %v39 = vand.u32 %v15, 4294901760
  %40 = vmatpush.msra.mxu0 %v39
  %v41 = vand.u32 %v21, 4294901760
  %v42 = vsub.f32 %v21, %v41
  %v43 = vand.u32 %v42, 4294901760
  %v44 = vsub.f32 %v42, %v43
  %v45 = vand.u32 %v44, 4294901760
  %46 = vmatmul.f32.gmra.mxu0 %v45
  %v47 = vpop.f32.mrf.mxu0
  %v48 = vadd.f32 0.0, %v47
  %49 = vdwg.mxu0
  %50 = vmatpush.msra.mxu0 0.0
  %51 = vmatpush.msra.mxu0 0.0
  %52 = vmatpush.msra.mxu0 0.0
  %53 = vmatpush.msra.mxu0 0.0
  %54 = vmatpush.msra.mxu0 0.0
  %55 = vmatpush.msra.mxu0 0.0
  %56 = vmatpush.msra.mxu0 0.0
  %57 = vmatpush.msra.mxu0 0.0
  %58 = vmatpush.msra.mxu0 0.0
  %59 = vmatpush.msra.mxu0 0.0
  %60 = vmatpush.msra.mxu0 0.0
  %61 = vmatpush.msra.mxu0 0.0
  %62 = vmatpush.msra.mxu0 0.0
  %63 = vmatpush.msra.mxu0 0.0
  %v64 = vand.u32 %v16, 4294901760
  %v65 = vsub.f32 %v16, %v64
  %v66 = vand.u32 %v65, 4294901760
  %v67 = vsub.f32 %v65, %v66
  %v68 = vand.u32 %v67, 4294901760
  %69 = vmatpush.msra.mxu0 %v68
  %v70 = vand.u32 %v15, 4294901760
  %v71 = vsub.f32 %v15, %v70
  %v72 = vand.u32 %v71, 4294901760
  %v73 = vsub.f32 %v71, %v72
  %v74 = vand.u32 %v73, 4294901760
  %75 = vmatpush.msra.mxu0 %v74
  %v76 = vand.u32 %v21, 4294901760
  %77 = vmatmul.f32.gmra.mxu0 %v76
  %v78 = vpop.f32.mrf.mxu0
  %v79 = vadd.f32 %v48, %v78
  %80 = vdwg.mxu0
  %81 = vmatpush.msra.mxu0 0.0
  %82 = vmatpush.msra.mxu0 0.0
  %83 = vmatpush.msra.mxu0 0.0
  %84 = vmatpush.msra.mxu0 0.0
  %85 = vmatpush.msra.mxu0 0.0
  %86 = vmatpush.msra.mxu0 0.0
  %87 = vmatpush.msra.mxu0 0.0
  %88 = vmatpush.msra.mxu0 0.0
  %89 = vmatpush.msra.mxu0 0.0
  %90 = vmatpush.msra.mxu0 0.0
  %91 = vmatpush.msra.mxu0 0.0
  %92 = vmatpush.msra.mxu0 0.0
  %93 = vmatpush.msra.mxu0 0.0
  %94 = vmatpush.msra.mxu0 0.0
  %v95 = vand.u32 %v16, 4294901760
  %v96 = vsub.f32 %v16, %v95
  %97 = vmatpush.msra.mxu0 %v96
  %v98 = vand.u32 %v15, 4294901760
  %v99 = vsub.f32 %v15, %v98
  %100 = vmatpush.msra.mxu0 %v99
  %v101 = vand.u32 %v21, 4294901760
  %v102 = vsub.f32 %v21, %v101
  %103 = vmatmul.f32.gmra.mxu0 %v102
  %v104 = vpop.f32.mrf.mxu0
  %v105 = vadd.f32 %v79, %v104
  %106 = vdwg.mxu0
  %107 = vmatpush.msra.mxu0 0.0
  %108 = vmatpush.msra.mxu0 0.0
  %109 = vmatpush.msra.mxu0 0.0
  %110 = vmatpush.msra.mxu0 0.0
  %111 = vmatpush.msra.mxu0 0.0
  %112 = vmatpush.msra.mxu0 0.0
  %113 = vmatpush.msra.mxu0 0.0
  %114 = vmatpush.msra.mxu0 0.0
  %115 = vmatpush.msra.mxu0 0.0
  %116 = vmatpush.msra.mxu0 0.0
  %117 = vmatpush.msra.mxu0 0.0
  %118 = vmatpush.msra.mxu0 0.0
  %119 = vmatpush.msra.mxu0 0.0
  %120 = vmatpush.msra.mxu0 0.0
  %v121 = vand.u32 %v16, 4294901760
  %122 = vmatpush.msra.mxu0 %v121
  %v123 = vand.u32 %v15, 4294901760
  %124 = vmatpush.msra.mxu0 %v123
  %v125 = vand.u32 %v21, 4294901760
  %v126 = vsub.f32 %v21, %v125
  %v127 = vand.u32 %v126, 4294901760
  %128 = vmatmul.f32.gmra.mxu0 %v127
  %v129 = vpop.f32.mrf.mxu0
  %v130 = vadd.f32 %v105, %v129
  %131 = vdwg.mxu0
  %132 = vmatpush.msra.mxu0 0.0
  %133 = vmatpush.msra.mxu0 0.0
  %134 = vmatpush.msra.mxu0 0.0
  %135 = vmatpush.msra.mxu0 0.0
  %136 = vmatpush.msra.mxu0 0.0
  %137 = vmatpush.msra.mxu0 0.0
  %138 = vmatpush.msra.mxu0 0.0
  %139 = vmatpush.msra.mxu0 0.0
  %140 = vmatpush.msra.mxu0 0.0
  %141 = vmatpush.msra.mxu0 0.0
  %142 = vmatpush.msra.mxu0 0.0
  %143 = vmatpush.msra.mxu0 0.0
  %144 = vmatpush.msra.mxu0 0.0
  %145 = vmatpush.msra.mxu0 0.0
  %v146 = vand.u32 %v16, 4294901760
  %v147 = vsub.f32 %v16, %v146
  %v148 = vand.u32 %v147, 4294901760
  %149 = vmatpush.msra.mxu0 %v148
  %v150 = vand.u32 %v15, 4294901760
  %v151 = vsub.f32 %v15, %v150
  %v152 = vand.u32 %v151, 4294901760
  %153 = vmatpush.msra.mxu0 %v152
  %v154 = vand.u32 %v21, 4294901760
  %155 = vmatmul.f32.gmra.mxu0 %v154
  %v156 = vpop.f32.mrf.mxu0
  %v157 = vadd.f32 %v130, %v156
  %158 = vdwg.mxu0
  %159 = vmatpush.msra.mxu0 0.0
  %160 = vmatpush.msra.mxu0 0.0
  %161 = vmatpush.msra.mxu0 0.0
  %162 = vmatpush.msra.mxu0 0.0
  %163 = vmatpush.msra.mxu0 0.0
  %164 = vmatpush.msra.mxu0 0.0
  %165 = vmatpush.msra.mxu0 0.0
  %166 = vmatpush.msra.mxu0 0.0
  %167 = vmatpush.msra.mxu0 0.0
  %168 = vmatpush.msra.mxu0 0.0
  %169 = vmatpush.msra.mxu0 0.0
  %170 = vmatpush.msra.mxu0 0.0
  %171 = vmatpush.msra.mxu0 0.0
  %172 = vmatpush.msra.mxu0 0.0
  %v173 = vand.u32 %v16, 4294901760
  %174 = vmatpush.msra.mxu0 %v173
  %v175 = vand.u32 %v15, 4294901760
  %176 = vmatpush.msra.mxu0 %v175
  %v177 = vand.u32 %v21, 4294901760
  %178 = vmatmul.f32.gmra.mxu0 %v177
  %v179 = vpop.f32.mrf.mxu0
  %v180 = vadd.f32 %v157, %v179
  %181 = vdwg.mxu0
  %v182 = vmul.f32 %v14, %v14
  %v184 = vsel %vm19, %v182, 0
  %186 = vmatpush.msra.mxu0 0.0
  %187 = vmatpush.msra.mxu0 0.0
  %188 = vmatpush.msra.mxu0 0.0
  %189 = vmatpush.msra.mxu0 0.0
  %190 = vmatpush.msra.mxu0 0.0
  %191 = vmatpush.msra.mxu0 0.0
  %192 = vmatpush.msra.mxu0 0.0
  %193 = vmatpush.msra.mxu0 0.0
  %194 = vmatpush.msra.mxu0 0.0
  %195 = vmatpush.msra.mxu0 0.0
  %196 = vmatpush.msra.mxu0 0.0
  %197 = vmatpush.msra.mxu0 0.0
  %198 = vmatpush.msra.mxu0 0.0
  %199 = vmatpush.msra.mxu0 0.0
  %v200 = vand.u32 %v18, 4294901760
  %201 = vmatpush.msra.mxu0 %v200
  %v202 = vand.u32 %v17, 4294901760
  %203 = vmatpush.msra.mxu0 %v202
  %v204 = vand.u32 %v184, 4294901760
  %v205 = vsub.f32 %v184, %v204
  %v206 = vand.u32 %v205, 4294901760
  %v207 = vsub.f32 %v205, %v206
  %v208 = vand.u32 %v207, 4294901760
  %209 = vmatmul.f32.gmra.mxu0 %v208
  %v210 = vpop.f32.mrf.mxu0
  %v211 = vadd.f32 0.0, %v210
  %212 = vdwg.mxu0
  %213 = vmatpush.msra.mxu0 0.0
  %214 = vmatpush.msra.mxu0 0.0
  %215 = vmatpush.msra.mxu0 0.0
  %216 = vmatpush.msra.mxu0 0.0
  %217 = vmatpush.msra.mxu0 0.0
  %218 = vmatpush.msra.mxu0 0.0
  %219 = vmatpush.msra.mxu0 0.0
  %220 = vmatpush.msra.mxu0 0.0
  %221 = vmatpush.msra.mxu0 0.0
  %222 = vmatpush.msra.mxu0 0.0
  %223 = vmatpush.msra.mxu0 0.0
  %224 = vmatpush.msra.mxu0 0.0
  %225 = vmatpush.msra.mxu0 0.0
  %226 = vmatpush.msra.mxu0 0.0
  %v227 = vand.u32 %v18, 4294901760
  %v228 = vsub.f32 %v18, %v227
  %v229 = vand.u32 %v228, 4294901760
  %v230 = vsub.f32 %v228, %v229
  %v231 = vand.u32 %v230, 4294901760
  %232 = vmatpush.msra.mxu0 %v231
  %v233 = vand.u32 %v17, 4294901760
  %v234 = vsub.f32 %v17, %v233
  %v235 = vand.u32 %v234, 4294901760
  %v236 = vsub.f32 %v234, %v235
  %v237 = vand.u32 %v236, 4294901760
  %238 = vmatpush.msra.mxu0 %v237
  %v239 = vand.u32 %v184, 4294901760
  %240 = vmatmul.f32.gmra.mxu0 %v239
  %v241 = vpop.f32.mrf.mxu0
  %v242 = vadd.f32 %v211, %v241
  %243 = vdwg.mxu0
  %244 = vmatpush.msra.mxu0 0.0
  %245 = vmatpush.msra.mxu0 0.0
  %246 = vmatpush.msra.mxu0 0.0
  %247 = vmatpush.msra.mxu0 0.0
  %248 = vmatpush.msra.mxu0 0.0
  %249 = vmatpush.msra.mxu0 0.0
  %250 = vmatpush.msra.mxu0 0.0
  %251 = vmatpush.msra.mxu0 0.0
  %252 = vmatpush.msra.mxu0 0.0
  %253 = vmatpush.msra.mxu0 0.0
  %254 = vmatpush.msra.mxu0 0.0
  %255 = vmatpush.msra.mxu0 0.0
  %256 = vmatpush.msra.mxu0 0.0
  %257 = vmatpush.msra.mxu0 0.0
  %v258 = vand.u32 %v18, 4294901760
  %v259 = vsub.f32 %v18, %v258
  %260 = vmatpush.msra.mxu0 %v259
  %v261 = vand.u32 %v17, 4294901760
  %v262 = vsub.f32 %v17, %v261
  %263 = vmatpush.msra.mxu0 %v262
  %v264 = vand.u32 %v184, 4294901760
  %v265 = vsub.f32 %v184, %v264
  %266 = vmatmul.f32.gmra.mxu0 %v265
  %v267 = vpop.f32.mrf.mxu0
  %v268 = vadd.f32 %v242, %v267
  %269 = vdwg.mxu0
  %270 = vmatpush.msra.mxu0 0.0
  %271 = vmatpush.msra.mxu0 0.0
  %272 = vmatpush.msra.mxu0 0.0
  %273 = vmatpush.msra.mxu0 0.0
  %274 = vmatpush.msra.mxu0 0.0
  %275 = vmatpush.msra.mxu0 0.0
  %276 = vmatpush.msra.mxu0 0.0
  %277 = vmatpush.msra.mxu0 0.0
  %278 = vmatpush.msra.mxu0 0.0
  %279 = vmatpush.msra.mxu0 0.0
  %280 = vmatpush.msra.mxu0 0.0
  %281 = vmatpush.msra.mxu0 0.0
  %282 = vmatpush.msra.mxu0 0.0
  %283 = vmatpush.msra.mxu0 0.0
  %v284 = vand.u32 %v18, 4294901760
  %285 = vmatpush.msra.mxu0 %v284
  %v286 = vand.u32 %v17, 4294901760
  %287 = vmatpush.msra.mxu0 %v286
  %v288 = vand.u32 %v184, 4294901760
  %v289 = vsub.f32 %v184, %v288
  %v290 = vand.u32 %v289, 4294901760
  %291 = vmatmul.f32.gmra.mxu0 %v290
  %v292 = vpop.f32.mrf.mxu0
  %v293 = vadd.f32 %v268, %v292
  %294 = vdwg.mxu0
  %295 = vmatpush.msra.mxu0 0.0
  %296 = vmatpush.msra.mxu0 0.0
  %297 = vmatpush.msra.mxu0 0.0
  %298 = vmatpush.msra.mxu0 0.0
  %299 = vmatpush.msra.mxu0 0.0
  %300 = vmatpush.msra.mxu0 0.0
  %301 = vmatpush.msra.mxu0 0.0
  %302 = vmatpush.msra.mxu0 0.0
  %303 = vmatpush.msra.mxu0 0.0
  %304 = vmatpush.msra.mxu0 0.0
  %305 = vmatpush.msra.mxu0 0.0
  %306 = vmatpush.msra.mxu0 0.0
  %307 = vmatpush.msra.mxu0 0.0
  %308 = vmatpush.msra.mxu0 0.0
  %v309 = vand.u32 %v18, 4294901760
  %v310 = vsub.f32 %v18, %v309
  %v311 = vand.u32 %v310, 4294901760
  %312 = vmatpush.msra.mxu0 %v311
  %v313 = vand.u32 %v17, 4294901760
  %v314 = vsub.f32 %v17, %v313
  %v315 = vand.u32 %v314, 4294901760
  %316 = vmatpush.msra.mxu0 %v315
  %v317 = vand.u32 %v184, 4294901760
  %318 = vmatmul.f32.gmra.mxu0 %v317
  %v319 = vpop.f32.mrf.mxu0
  %v320 = vadd.f32 %v293, %v319
  %321 = vdwg.mxu0
  %322 = vmatpush.msra.mxu0 0.0
  %323 = vmatpush.msra.mxu0 0.0
  %324 = vmatpush.msra.mxu0 0.0
  %325 = vmatpush.msra.mxu0 0.0
  %326 = vmatpush.msra.mxu0 0.0
  %327 = vmatpush.msra.mxu0 0.0
  %328 = vmatpush.msra.mxu0 0.0
  %329 = vmatpush.msra.mxu0 0.0
  %330 = vmatpush.msra.mxu0 0.0
  %331 = vmatpush.msra.mxu0 0.0
  %332 = vmatpush.msra.mxu0 0.0
  %333 = vmatpush.msra.mxu0 0.0
  %334 = vmatpush.msra.mxu0 0.0
  %335 = vmatpush.msra.mxu0 0.0
  %v336 = vand.u32 %v18, 4294901760
  %337 = vmatpush.msra.mxu0 %v336
  %v338 = vand.u32 %v17, 4294901760
  %339 = vmatpush.msra.mxu0 %v338
  %v340 = vand.u32 %v184, 4294901760
  %341 = vmatmul.f32.gmra.mxu0 %v340
  %v342 = vpop.f32.mrf.mxu0
  %v343 = vadd.f32 %v320, %v342
  %344 = vdwg.mxu0
  %v345 = vmul.f32 %v180, %v180
  %vm346 = vcmask 58368
  %v347 = vsel %vm346, %v345, 0.0
  %348 = vadd.xlane.f32.xlu0 %v347
  %v349 = vpop.xlane.xlu0 %348
  %v350 = vsub.f32 %v349, %v343
  %v351 = vmul.f32 %v350, 0.5
  %vm352 = vcmask 1024
  %353 = vst.msk [vmem:[%s3] sm:$0x3] %vm352, %v351
  // Predicated region
  $region14: #{tpu_custom_call.1} parent=0 // pred_check
    _
  $region15: #{tpu_custom_call.1} parent=0 // pred_check_branch
    %355 = sbr.rel (0) target = $region17
  $region16: #{tpu_custom_call.1} parent=0 // pred_region
    _
  $region17: #{tpu_custom_call.1} parent=0 // pred_fallthru
    _
  // Predicated region
  $region18: #{tpu_custom_call.1} parent=0 // pred_check
    _
  $region19: #{tpu_custom_call.1} parent=0 // pred_check_branch
    %357 = sbr.rel (0) target = $region21
  $region20: #{tpu_custom_call.1} parent=0 // pred_region
    _
  $region21: #{tpu_custom_call.1} parent=0 // pred_fallthru
    _

</llo_original>
